<compile_context>
chip_gen: v7x
topology: tpu7x:2x2x1
jax: 0.10.0
libtpu: 0.0.40
codegen_flags: <defaults>
</compile_context>

<pallas_src>
import functools

import jax
import jax.numpy as jnp
from jax.experimental import pallas as pl
from jax.experimental.pallas import tpu as pltpu


def _round_up(x, m):
    return ((x + m - 1) // m) * m


def _fold_t2v(w, b, w0, b0):
    """Fold (w, b, w0, b0) of SineActivation into full-width (1, F) vectors."""
    f = w.shape[-1] + 1
    w_full = jnp.concatenate([w.reshape(-1), w0.reshape(-1)]).reshape(1, f).astype(jnp.float32)
    b_full = jnp.concatenate([b.reshape(-1), b0.reshape(-1)]).reshape(1, f).astype(jnp.float32)
    return w_full, b_full


def _split_bf16x3(x_f32):
    """Split an f32 array into three bf16 planes with x ~= hi + mid + lo (err ~2^-24)."""
    hi = x_f32.astype(jnp.bfloat16)
    r1 = x_f32 - hi.astype(jnp.float32)
    mid = r1.astype(jnp.bfloat16)
    lo = (r1 - mid.astype(jnp.float32)).astype(jnp.bfloat16)
    return hi, mid, lo


# ---------------------------------------------------------------------------
# Standalone SineActivation (Time2Vec) kernels.
# ---------------------------------------------------------------------------
def sine_activation_rows_kernel(tau_ref, w_ref, b_ref, out_ref):
    # tau_ref: (tm, 1); w_ref/b_ref: (1, F); out_ref: (tm, F) lane-dense when F%128==0.
    F = out_ref.shape[-1]
    z = tau_ref[...] * w_ref[...] + b_ref[...]
    col = jax.lax.broadcasted_iota(jnp.int32, (1, F), 1)
    out_ref[...] = jnp.where(col < F - 1, jnp.sin(z), z)


def sine_activation_cols_kernel(tau_ref, w_ref, b_ref, out_ref):
    # Transposed layout for small / non-128-multiple F:
    # tau_ref: (1, TC) lane-dense; w_ref/b_ref: (F, 1); out_ref: (F, TC) lane-dense.
    F = out_ref.shape[0]
    z = tau_ref[...] * w_ref[...] + b_ref[...]
    row = jax.lax.broadcasted_iota(jnp.int32, (F, 1), 0)
    out_ref[...] = jnp.where(row < F - 1, jnp.sin(z), z)


def sine_activation(tau, w, b, w0, b0, *, block_rows=1024, block_cols=2048):
    """Time2Vec / SineActivation: tau (B, S) -> (B, S, out_features)."""
    B, S = tau.shape
    F = w.shape[-1] + 1
    rows = B * S
    w_row, b_row = _fold_t2v(w, b, w0, b0)                       # (1, F)

    if F % 128 == 0:
        # Row-major (rows, F): unmasked lane-dense stores, no host-side transpose.
        tm = min(block_rows, _round_up(rows, 8))
        rows_pad = _round_up(rows, tm)
        tau2 = tau.reshape(rows, 1).astype(jnp.float32)
        if rows_pad != rows:
            tau2 = jnp.pad(tau2, ((0, rows_pad - rows), (0, 0)))
        out = pl.pallas_call(
            sine_activation_rows_kernel,
            out_shape=jax.ShapeDtypeStruct((rows_pad, F), jnp.float32),
            grid_spec=pltpu.PrefetchScalarGridSpec(
                num_scalar_prefetch=0,
                grid=(rows_pad // tm,),
                in_specs=[
                    pl.BlockSpec((tm, 1), lambda i: (i, 0)),
                    pl.BlockSpec((1, F), lambda i: (0, 0)),
                    pl.BlockSpec((1, F), lambda i: (0, 0)),
                ],
                out_specs=pl.BlockSpec((tm, F), lambda i: (i, 0)),
            ),
            compiler_params=pltpu.CompilerParams(
                dimension_semantics=("parallel",),
                vmem_limit_bytes=32 * 1024 * 1024),
        )(tau2, w_row, b_row)
        return out[:rows].reshape(B, S, F)

    # Small / non-128-multiple F: transposed (F, rows) layout keeps both the tau load
    # and the output store lane-dense; the wrapper transposes back at the end.
    w_col = w_row.reshape(F, 1)
    b_col = b_row.reshape(F, 1)
    tc = min(block_cols, _round_up(rows, 128))
    rows_pad = _round_up(rows, tc)
    tau_t = tau.reshape(1, rows).astype(jnp.float32)
    if rows_pad != rows:
        tau_t = jnp.pad(tau_t, ((0, 0), (0, rows_pad - rows)))
    out_t = pl.pallas_call(
        sine_activation_cols_kernel,
        out_shape=jax.ShapeDtypeStruct((F, rows_pad), jnp.float32),
        grid_spec=pltpu.PrefetchScalarGridSpec(
            num_scalar_prefetch=0,
            grid=(rows_pad // tc,),
            in_specs=[
                pl.BlockSpec((1, tc), lambda i: (0, i)),
                pl.BlockSpec((F, 1), lambda i: (0, 0)),
                pl.BlockSpec((F, 1), lambda i: (0, 0)),
            ],
            out_specs=pl.BlockSpec((F, tc), lambda i: (0, i)),
        ),
        compiler_params=pltpu.CompilerParams(
            dimension_semantics=("parallel",),
            vmem_limit_bytes=32 * 1024 * 1024),
    )(tau_t, w_col, b_col)
    return out_t[:, :rows].T.reshape(B, S, F)


# ---------------------------------------------------------------------------
# Fused BertEmbeddings kernel: in-kernel gather + 3x Time2Vec + sum + LayerNorm.
# ---------------------------------------------------------------------------
def bert_embeddings_kernel(ids_ref, tau_ref, hi_ref, mid_ref, lo_ref, par_ref,
                           out_ref, *, eps):
    tm, H = out_ref.shape
    Vc = hi_ref.shape[0]

    par = par_ref[...]                                # (8, H) stacked constants
    w_age, b_age = par[0:1, :], par[1:2, :]
    w_del, b_del = par[2:3, :], par[3:4, :]
    gamma, beta = par[4:5, :], par[5:6, :]

    # Fused gather of word/seg/mod/posi rows: ids are pre-offset into disjoint ranges
    # of the combined table, so a single multi-hot (tm, Vc) matrix contracted with the
    # VMEM-resident table yields word+seg+mod+posi summed.  The bf16x3 split planes
    # reconstruct the f32 table exactly enough (~2^-24) on the bf16 MXU.
    ids = ids_ref[...]                                # (tm, 4) int32
    vocab = jax.lax.broadcasted_iota(jnp.int32, (tm, Vc), 1)
    hot = ((vocab == ids[:, 0:1]) | (vocab == ids[:, 1:2])
           | (vocab == ids[:, 2:3]) | (vocab == ids[:, 3:4]))
    hot = jnp.where(hot, 1.0, 0.0).astype(jnp.bfloat16)

    x = jnp.dot(hot, hi_ref[...], preferred_element_type=jnp.float32)
    x = x + jnp.dot(hot, mid_ref[...], preferred_element_type=jnp.float32)
    x = x + jnp.dot(hot, lo_ref[...], preferred_element_type=jnp.float32)

    # Three Time2Vec terms (age / delays / NPI; the original forward reuses the delays
    # parameters for NPI), with a single sin-vs-linear select over the summed terms.
    tau = tau_ref[...]                                # (tm, 3) f32: [age, delays, npi]
    z_age = tau[:, 0:1] * w_age + b_age
    z_del = tau[:, 1:2] * w_del + b_del
    z_npi = tau[:, 2:3] * w_del + b_del
    s = jnp.sin(z_age) + jnp.sin(z_del) + jnp.sin(z_npi)
    lin = z_age + z_del + z_npi
    col = jax.lax.broadcasted_iota(jnp.int32, (1, H), 1)
    x = x + jnp.where(col < (H - 1), s, lin)

    # LayerNorm (stats in f32, eps inside rsqrt — matches torch).
    mu = jnp.mean(x, axis=-1, keepdims=True)
    xc = x - mu
    var = jnp.mean(xc * xc, axis=-1, keepdims=True)
    y = xc * jax.lax.rsqrt(var + eps)
    out_ref[...] = (y * gamma + beta).astype(out_ref.dtype)


def bert_embeddings_forward(params, word_ids, modalities_ids, age, delays,
                            seg_ids, posi_ids, npi, *, eps=1e-12,
                            block_rows=1024, out_dtype=jnp.float32):
    B, S = word_ids.shape
    H = params["word_emb"].shape[-1]
    rows = B * S

    # Large row blocks (multiple of 8); rows > block_rows naturally gives >=2 grid
    # steps so ("parallel",) can shard across TensorCores on multi-TC chips.
    tm = min(block_rows, _round_up(rows, 8))
    rows_pad = _round_up(rows, tm)

    # --- combined embedding table, kept VMEM-resident by a constant-index spec ----
    # TODO(synk): for production-size word vocabularies (e.g. 30k x 768 ~= 92 MiB f32)
    # do NOT make the word table VMEM-resident (v7x has only 64 MiB physical VMEM);
    # keep the word gather in XLA or use a manual DMA gather and fuse only seg/mod/posi.
    tabs = [params["word_emb"], params["seg_emb"], params["mod_emb"], params["posi_emb"]]
    sizes = [int(t.shape[0]) for t in tabs]
    off_seg = sizes[0]
    off_mod = off_seg + sizes[1]
    off_pos = off_mod + sizes[2]
    vtot = off_pos + sizes[3]
    vc = _round_up(vtot, 128)
    tab = jnp.concatenate([t.astype(jnp.float32) for t in tabs], axis=0)
    tab = jnp.pad(tab, ((0, vc - vtot), (0, 0)))
    tab_hi, tab_mid, tab_lo = _split_bf16x3(tab)

    # --- one packed (rows, 4) int32 ids array and one (rows, 3) f32 tau array -----
    ids = jnp.stack([
        word_ids.reshape(-1),
        seg_ids.reshape(-1) + off_seg,
        modalities_ids.reshape(-1) + off_mod,
        posi_ids.reshape(-1) + off_pos,
    ], axis=-1).astype(jnp.int32)
    tau = jnp.stack([age.reshape(-1), delays.reshape(-1), npi.reshape(-1)],
                    axis=-1).astype(jnp.float32)
    if rows_pad != rows:
        ids = jnp.pad(ids, ((0, rows_pad - rows), (0, 0)))
        tau = jnp.pad(tau, ((0, rows_pad - rows), (0, 0)))

    # --- stacked (8, H) constant parameter block -----------------------------------
    w_age, b_age = _fold_t2v(params["age_w"], params["age_b"],
                             params["age_w0"], params["age_b0"])
    w_del, b_del = _fold_t2v(params["del_w"], params["del_b"],
                             params["del_w0"], params["del_b0"])
    par = jnp.concatenate([
        w_age, b_age, w_del, b_del,
        params["gamma"].reshape(1, H).astype(jnp.float32),
        params["beta"].reshape(1, H).astype(jnp.float32),
        jnp.zeros((2, H), jnp.float32),
    ], axis=0)                                        # (8, H)

    tab_spec = pl.BlockSpec((vc, H), lambda i: (0, 0))

    out = pl.pallas_call(
        functools.partial(bert_embeddings_kernel, eps=eps),
        out_shape=jax.ShapeDtypeStruct((rows_pad, H), out_dtype),
        grid_spec=pltpu.PrefetchScalarGridSpec(
            num_scalar_prefetch=0,
            grid=(rows_pad // tm,),
            in_specs=[
                pl.BlockSpec((tm, 4), lambda i: (i, 0)),    # packed ids (word/seg/mod/posi)
                pl.BlockSpec((tm, 3), lambda i: (i, 0)),    # packed tau (age/delays/npi)
                tab_spec, tab_spec, tab_spec,               # bf16x3 combined table
                pl.BlockSpec((8, H), lambda i: (0, 0)),     # stacked params
            ],
            out_specs=pl.BlockSpec((tm, H), lambda i: (i, 0)),
        ),
        compiler_params=pltpu.CompilerParams(
            dimension_semantics=("parallel",),
            vmem_limit_bytes=32 * 1024 * 1024,              # explicit (v5e default is 16 MiB)
        ),
    )(ids, tau, tab_hi, tab_mid, tab_lo, par)

    # TODO(synk): nn.Dropout omitted (eval-mode identity); use pltpu.prng_* for training.
    # TODO(synk): output can be emitted as bf16 (out_dtype=jnp.bfloat16) to halve the
    # dominant output write if the downstream encoder accepts it.
    return out[:rows].reshape(B, S, H)


# ---------------------------------------------------------------------------
# Pure-JAX references.
# ---------------------------------------------------------------------------
def time2vec_ref(tau, w, b, w0, b0):
    v1 = jnp.sin(tau[..., None] * w.reshape(-1) + b)
    v2 = tau[..., None] * w0.reshape(-1) + b0
    return jnp.concatenate([v1, v2], axis=-1)


def bert_embeddings_ref(params, word_ids, modalities_ids, age, delays,
                        seg_ids, posi_ids, npi, eps=1e-12):
    x = params["word_emb"][word_ids]
    x = x + params["seg_emb"][seg_ids]
    x = x + params["mod_emb"][modalities_ids]
    x = x + time2vec_ref(age, params["age_w"], params["age_b"], params["age_w0"], params["age_b0"])
    x = x + time2vec_ref(delays, params["del_w"], params["del_b"], params["del_w0"], params["del_b0"])
    x = x + time2vec_ref(npi, params["del_w"], params["del_b"], params["del_w0"], params["del_b0"])
    x = x + params["posi_emb"][posi_ids]
    mu = jnp.mean(x, axis=-1, keepdims=True)
    var = jnp.mean((x - mu) ** 2, axis=-1, keepdims=True)
    y = (x - mu) * jax.lax.rsqrt(var + eps)
    return y * params["gamma"] + params["beta"]


def make_positional_table(max_position, hidden):
    # Matches BertEmbeddings._init_posi_embedding exactly.
    pos = jnp.arange(max_position, dtype=jnp.float32)[:, None]
    idx = jnp.arange(hidden, dtype=jnp.float32)[None, :]
    angle = pos / jnp.power(10000.0, 2.0 * idx / hidden)
    even = (jnp.arange(hidden) % 2 == 0)[None, :]
    return jnp.where(even, jnp.sin(angle), jnp.cos(angle)).astype(jnp.float32)


if __name__ == "__main__":
    # Small config consistent with the module (activation=True path, all features on).
    B, S = 2, 8
    hidden = 128          # multiple of 128 -> lane-dense output stores
    vocab_size = 30
    seg_vocab = 2
    mod_vocab = 4
    max_pos = 64
    eps = 1e-12
    in_features = 1       # SineActivation requires in_features == 1 (pos.reshape(-1, 1) @ w)

    key = jax.random.PRNGKey(0)
    keys = jax.random.split(key, 16)

    params = {
        "word_emb": jax.random.normal(keys[0], (vocab_size, hidden), jnp.float32),
        "seg_emb": jax.random.normal(keys[1], (seg_vocab, hidden), jnp.float32),
        "mod_emb": jax.random.normal(keys[2], (mod_vocab, hidden), jnp.float32),
        "posi_emb": make_positional_table(max_pos, hidden),
        "age_w0": jax.random.normal(keys[3], (in_features, 1), jnp.float32),
        "age_b0": jax.random.normal(keys[4], (1,), jnp.float32),
        "age_w": jax.random.normal(keys[5], (in_features, hidden - 1), jnp.float32),
        "age_b": jax.random.normal(keys[6], (hidden - 1,), jnp.float32),
        "del_w0": jax.random.normal(keys[7], (in_features, 1), jnp.float32),
        "del_b0": jax.random.normal(keys[8], (1,), jnp.float32),
        "del_w": jax.random.normal(keys[9], (in_features, hidden - 1), jnp.float32),
        "del_b": jax.random.normal(keys[10], (hidden - 1,), jnp.float32),
        "gamma": jnp.ones((hidden,), jnp.float32),
        "beta": jnp.zeros((hidden,), jnp.float32),
    }

    word_ids = jax.random.randint(keys[11], (B, S), 0, vocab_size)
    seg_ids = jax.random.randint(keys[12], (B, S), 0, seg_vocab)
    mod_ids = jax.random.randint(keys[13], (B, S), 0, mod_vocab)
    posi_ids = jnp.broadcast_to(jnp.arange(S, dtype=jnp.int32), (B, S))
    age = jax.random.normal(keys[14], (B, S), jnp.float32)
    delays = jax.random.normal(keys[15], (B, S), jnp.float32)
    npi = jax.random.normal(jax.random.fold_in(key, 99), (B, S), jnp.float32)

    # 1) Standalone improved SineActivation (Time2Vec) kernel (row-major path, F=128).
    t2v_out = sine_activation(age, params["age_w"], params["age_b"],
                              params["age_w0"], params["age_b0"])
    t2v_out = jax.block_until_ready(t2v_out)
    t2v_expect = time2vec_ref(age, params["age_w"], params["age_b"],
                              params["age_w0"], params["age_b0"])
    assert t2v_out.shape == (B, S, hidden), t2v_out.shape
    assert jnp.allclose(t2v_out, t2v_expect, atol=1e-5, rtol=1e-5), "SineActivation mismatch"

    # 2) Full fused BertEmbeddings forward (in-kernel gathers + Time2Vec + LayerNorm).
    out = bert_embeddings_forward(params, word_ids, mod_ids, age, delays,
                                  seg_ids, posi_ids, npi, eps=eps)
    out = jax.block_until_ready(out)
    ref = bert_embeddings_ref(params, word_ids, mod_ids, age, delays,
                              seg_ids, posi_ids, npi, eps=eps)
    assert out.shape == (B, S, hidden), out.shape
    assert jnp.allclose(out, ref, atol=2e-5, rtol=2e-5), "BertEmbeddings mismatch"

    print("KERNEL_OK")
</pallas_src>

<mosaic_0001>
module attributes {stable_mosaic.version = 11 : i64} {
  func.func @sine_activation_rows_kernel(%arg0: i32, %arg1: memref<16x1xf32, #tpu.memory_space<vmem>>, %arg2: memref<1x128xf32, #tpu.memory_space<vmem>>, %arg3: memref<1x128xf32, #tpu.memory_space<vmem>>, %arg4: memref<16x128xf32, #tpu.memory_space<vmem>>) attributes {dimension_semantics = [#tpu.dimension_semantics<parallel>], iteration_bounds = array<i64: 1>, scalar_prefetch = 0 : i64, scratch_operands = 0 : i64, tpu.core_type = #tpu.core_type<tc>, window_params = [{transform_indices = @transform_0, window_bounds = array<i64: 16, 1>}, {pipeline_mode = #tpu.pipeline_mode<synchronous>, transform_indices = @transform_1, window_bounds = array<i64: 1, 128>}, {pipeline_mode = #tpu.pipeline_mode<synchronous>, transform_indices = @transform_2, window_bounds = array<i64: 1, 128>}, {transform_indices = @transform_3, window_bounds = array<i64: 16, 128>}]} {
    %c0 = arith.constant 0 : index
    %c0_0 = arith.constant 0 : index
    %0 = vector.load %arg1[%c0, %c0_0] : memref<16x1xf32, #tpu.memory_space<vmem>>, vector<16x1xf32>
    %c0_1 = arith.constant 0 : index
    %c0_2 = arith.constant 0 : index
    %1 = vector.load %arg2[%c0_1, %c0_2] : memref<1x128xf32, #tpu.memory_space<vmem>>, vector<1x128xf32>
    %2 = vector.broadcast %0 : vector<16x1xf32> to vector<16x128xf32>
    %3 = vector.broadcast %1 : vector<1x128xf32> to vector<16x128xf32>
    %4 = arith.mulf %2, %3 : vector<16x128xf32>
    %c0_3 = arith.constant 0 : index
    %c0_4 = arith.constant 0 : index
    %5 = vector.load %arg3[%c0_3, %c0_4] : memref<1x128xf32, #tpu.memory_space<vmem>>, vector<1x128xf32>
    %6 = vector.broadcast %5 : vector<1x128xf32> to vector<16x128xf32>
    %7 = arith.addf %4, %6 : vector<16x128xf32>
    %8 = tpu.iota {dimensions = array<i32: 1>} : vector<1x128xi32>
    %c127_i32 = arith.constant 127 : i32
    %9 = vector.broadcast %c127_i32 : i32 to vector<1x128xi32>
    %10 = arith.cmpi slt, %8, %9 : vector<1x128xi32>
    %11 = math.sin %7 : vector<16x128xf32>
    %12 = vector.shape_cast %10 : vector<1x128xi1> to vector<1x128xi1>
    %13 = vector.broadcast %12 : vector<1x128xi1> to vector<16x128xi1>
    %14 = arith.select %13, %11, %7 : vector<16x128xi1>, vector<16x128xf32>
    %c0_5 = arith.constant 0 : index
    %c0_6 = arith.constant 0 : index
    %15 = vector.load %arg4[%c0_5, %c0_6] : memref<16x128xf32, #tpu.memory_space<vmem>>, vector<16x128xf32>
    tpu.vector_store %arg4[%c0_5, %c0_6], %14 {strides = array<i32>} : memref<16x128xf32, #tpu.memory_space<vmem>>, vector<16x128xf32>,
    return
  }
  func.func @transform_0(%arg0: i32) -> (i32, i32) {
    %c0_i32 = arith.constant 0 : i32
    %c0_i32_0 = arith.constant 0 : i32
    return %arg0, %c0_i32 : i32, i32
  }
  func.func @transform_1(%arg0: i32) -> (i32, i32) {
    %c0_i32 = arith.constant 0 : i32
    %c0_i32_0 = arith.constant 0 : i32
    %c0_i32_1 = arith.constant 0 : i32
    return %c0_i32, %c0_i32_0 : i32, i32
  }
  func.func @transform_2(%arg0: i32) -> (i32, i32) {
    %c0_i32 = arith.constant 0 : i32
    %c0_i32_0 = arith.constant 0 : i32
    %c0_i32_1 = arith.constant 0 : i32
    return %c0_i32, %c0_i32_0 : i32, i32
  }
  func.func @transform_3(%arg0: i32) -> (i32, i32) {
    %c0_i32 = arith.constant 0 : i32
    %c0_i32_0 = arith.constant 0 : i32
    return %arg0, %c0_i32 : i32, i32
  }
}

</mosaic_0001>

<llo_original>
// kernel: tpu_custom_call.1
$region0: #{tpu_custom_call.1}
  #allocation0 [shape = 'u32[]', space=smem, size = 0x4, offset = 0x4, fixed_abs, tag = 'smem constant byte address 0x4 - core index']
  #allocation1 [shape = 'u32[144,128]{1,0:T(1,128)}', space=vmem, size = 0x12000, scoped, tag = 'internal scratch']
  %s0 = inlined_call_operand.vmem [shape: f32[16,1], index: 0, kind: input, shape index: {}]
  %s1 = inlined_call_operand.vmem [shape: f32[1,128], index: 1, kind: input, shape index: {}]
  %s2 = inlined_call_operand.vmem [shape: f32[1,128], index: 2, kind: input, shape index: {}]
  %s3 = inlined_call_operand.hbm [shape: f32[16,128], index: 3, kind: output, shape index: {}]
  %s4 = sld [smem:[#allocation0]]
  $region22: #{tpu_custom_call.1} parent=0
    _
  %s6 = ssub.s32 1, %s4
  %s7 = scalar_select 0, %s6, %s4
  $region1: #{tpu_custom_call.1} parent=0
    #allocation2 [shape = 'u8[8192]{0}', space=vmem, size = 0x2000, scoped, tag = 'output window, operand 0, single buffered']
    #allocation3 [shape = 's32[1]{0}', space=sflag, size = 0x4, scoped, tag = 'scoped memory for tpu_custom_call.1']
    %8 = vsyncpa [#allocation3], 0
    // Predicated region
    $region2: #{tpu_custom_call.1} parent=1 // pred_check
      _
    $region3: #{tpu_custom_call.1} parent=1 // pred_check_branch
      %10 = sbr.rel (0) target = $region5
    $region4: #{tpu_custom_call.1} parent=1 // pred_region
      _
    $region5: #{tpu_custom_call.1} parent=1 // pred_fallthru
      _
    // Predicated region
    $region6: #{tpu_custom_call.1} parent=1 // pred_check
      _
    $region7: #{tpu_custom_call.1} parent=1 // pred_check_branch
      %12 = sbr.rel (0) target = $region9
    $region8: #{tpu_custom_call.1} parent=1 // pred_region
      _
    $region9: #{tpu_custom_call.1} parent=1 // pred_fallthru
      _
    // Predicated region
    $region10: #{tpu_custom_call.1} parent=1 // pred_check
      _
    $region11: #{tpu_custom_call.1} parent=1 // pred_check_branch
      %14 = sbr.rel (0) target = $region13
    $region12: #{tpu_custom_call.1} parent=1 // pred_region
      _
    $region13: #{tpu_custom_call.1} parent=1 // pred_fallthru
      _
    %v15 = vld [vmem:[%s0] sm:$0xff]
    %v16 = vld [vmem:[%s0 + $0x8] sm:$0xff]
    %v17 = vld [vmem:[%s1] sm:$0x1]
    %19 = vset.pattern.permute.xlu0 0
    %20 = vperm.xlu0 %19, %v15
    %v21 = vpop.permute.xlu0 %20
    %24 = vset.pattern.permute.xlu0 0
    %25 = vperm.xlu0 %24, %v16
    %v26 = vpop.permute.xlu0 %25
    %v29 = vlaneseq
    %v30 = vshrl.u32 %v29, 7
    %v31 = vsub.s32 0, %v30
    %v32 = vrot.slane %v17, %v31
    %v34 = vmul.f32 %v21, %v32
    %v35 = vmul.f32 %v26, %v32
    %v36 = vld [vmem:[%s2] sm:$0x1]
    %v38 = vlaneseq
    %v39 = vshrl.u32 %v38, 7
    %v40 = vsub.s32 0, %v39
    %v41 = vrot.slane %v36, %v40
    %v43 = vadd.f32 %v34, %v41
    %v44 = vadd.f32 %v35, %v41
    %v45 = vlaneseq
    %v46 = vand.u32 %v45, 127
    %vm47 = vcmp.lt.s32.totalorder %v46, 127
    %v48 = vand.u32 2147483647, %v43
    %vm49 = vcmp.le.f32.partialorder %v48, 0.7853982
    %vm50 = vcmp.lt.s32.totalorder %v43, 0
    %v51 = vand.u32 %v43, 2139095040
    %v52 = vshrl.u32 %v51, 23
    %v53 = vsub.s32 %v52, 127
    %v54 = vand.u32 2147483647, %v43
    %v55 = vand.u32 %v54, 8388607
    %v56 = vor.u32 %v55, 8388608
    %v57 = vsub.s32 0, %v56
    %v58 = vadd.s32 %v53, 1
    %vm59 = vcmp.gt.s32.totalorder %v58, 0
    %v60 = vsel %vm59, %v58, 0
    %v61 = vshrl.u32 %v60, 5
    %v62 = vand.u32 %v60, 31
    %v63 = vsub.s32 32, %v62
    %v64 = vshrl.u32 683565275, %v63
    %v65 = vshll.u32 683565275, %v62
    %v66 = vshrl.u32 2475754826, %v63
    %v67 = vor.u32 %v65, %v66
    %v68 = vshll.u32 2475754826, %v62
    %v69 = vshrl.u32 2131351028, %v63
    %v70 = vor.u32 %v68, %v69
    %v71 = vshll.u32 2131351028, %v62
    %v72 = vshrl.u32 2102212464, %v63
    %v73 = vor.u32 %v71, %v72
    %v74 = vshll.u32 2102212464, %v62
    %v75 = vshrl.u32 920167782, %v63
    %v76 = vor.u32 %v74, %v75
    %v77 = vshll.u32 920167782, %v62
    %v78 = vshrl.u32 1326507024, %v63
    %v79 = vor.u32 %v77, %v78
    %vm80 = vcmp.lt.s32.totalorder %v61, 1
    %vm81 = vcmp.lt.s32.totalorder %v61, 2
    %vm82 = vcmp.lt.s32.totalorder %v61, 3
    %vm83 = vcmp.lt.s32.totalorder %v61, 4
    %v84 = vsel %vm80, %v64, %v67
    %v85 = vsel %vm83, %v73, 2102212464
    %v86 = vsel %vm82, %v70, %v85
    %v87 = vsel %vm81, %v84, %v86
    %v88 = vsel %vm80, %v67, %v70
    %v89 = vsel %vm83, %v76, 920167782
    %v90 = vsel %vm82, %v73, %v89
    %v91 = vsel %vm81, %v88, %v90
    %v92 = vsel %vm80, %v70, %v73
    %v93 = vsel %vm83, %v79, 1326507024
    %v94 = vsel %vm82, %v76, %v93
    %v95 = vsel %vm81, %v92, %v94
    %v96 = vshll.u32 %v56, 8
    %v97 = vmul.u32.u64.compose %v96, %v95
    %v98 = vextract.low.u32 %v97
    %v99 = vextract.high.u32 %v97
    %v100 = vmul.u32.u64.compose %v96, %v91
    %v101 = vextract.low.u32 %v100
    %v102 = vextract.high.u32 %v100
    %v103 = vmul.u32 %v96, %v87
    %v104 = vadd.s32 %v99, %v101
    %vm105 = vc.u32 %v99, %v101
    %v106 = vadd.s32 %v102, 1
    %v107 = vsel %vm105, %v106, %v102
    %v108 = vadd.s32 %v103, %v107
    %v109 = vadd.s32 %v108, 536870912
    %v110 = vshrl.u32 %v109, 30
    %v111 = vshll.u32 %v110, 30
    %v112 = vsub.s32 %v108, %v111
    %vm113 = vcmp.lt.s32.totalorder %v112, 0
    %v114 = vsub.s32 0, %v112
    %v115 = vsel %vm113, %v114, %v112
    %v116 = vclz %v115
    %v117 = vsub.s32 %v116, 2
    %vm118 = vcmp.gt.s32.totalorder 0, %v117
    %v119 = vsel %vm118, 0, %v117
    %v120 = vsub.s32 32, %v119
    %v121 = vshll.u32 %v112, %v119
    %v122 = vshrl.u32 %v104, %v120
    %v123 = vor.u32 %v121, %v122
    %v124 = vsub.s32 4294967266, %v119
    %v125 = vadd.s32 %v124, 127
    %v126 = vshll.u32 %v125, 23
    %v127 = vor.u32 4788187, %v126
    %v128 = vand.u32 2147483647, %v127
    %v130 = vcvt.s32.f32 %v123
    %v131 = vmul.f32 %v130, %v128
    %v132 = vxor.u32 %v131, 2147483648
    %v133 = vsel %vm50, %v132, %v131
    %v134 = vsub.s32 4, %v110
    %v135 = vsel %vm50, %v134, %v110
    %v136 = vsel %vm49, %v43, %v133
    %v137 = vsel %vm49, 0, %v135
    %v138 = vcosq.f32.pop %v136
    %v139 = vsinq.f32.pop %v136
    %vm140 = vweird.f32 %v43
    %v141 = vadd.s32 %v137, 3
    %v142 = vand.u32 %v141, 3
    %vm143 = vcmp.lt.s32.totalorder %v142, 2
    %vm144 = vcmp.eq.s32.totalorder %v142, 0
    %v145 = vxor.u32 %v139, 2147483648
    %v146 = vsel %vm144, %v138, %v145
    %vm147 = vcmp.eq.s32.totalorder %v142, 2
    %v148 = vxor.u32 %v138, 2147483648
    %v149 = vsel %vm147, %v148, %v139
    %v150 = vsel %vm143, %v146, %v149
    %v151 = vsel %vm140, nan, %v150
    %v152 = vand.u32 2147483647, %v44
    %vm153 = vcmp.le.f32.partialorder %v152, 0.7853982
    %vm154 = vcmp.lt.s32.totalorder %v44, 0
    %v155 = vand.u32 %v44, 2139095040
    %v156 = vshrl.u32 %v155, 23
    %v157 = vsub.s32 %v156, 127
    %v158 = vand.u32 2147483647, %v44
    %v159 = vand.u32 %v158, 8388607
    %v160 = vor.u32 %v159, 8388608
    %v161 = vsub.s32 0, %v160
    %v162 = vadd.s32 %v157, 1
    %vm163 = vcmp.gt.s32.totalorder %v162, 0
    %v164 = vsel %vm163, %v162, 0
    %v165 = vshrl.u32 %v164, 5
    %v166 = vand.u32 %v164, 31
    %v167 = vsub.s32 32, %v166
    %v168 = vshrl.u32 683565275, %v167
    %v169 = vshll.u32 683565275, %v166
    %v170 = vshrl.u32 2475754826, %v167
    %v171 = vor.u32 %v169, %v170
    %v172 = vshll.u32 2475754826, %v166
    %v173 = vshrl.u32 2131351028, %v167
    %v174 = vor.u32 %v172, %v173
    %v175 = vshll.u32 2131351028, %v166
    %v176 = vshrl.u32 2102212464, %v167
    %v177 = vor.u32 %v175, %v176
    %v178 = vshll.u32 2102212464, %v166
    %v179 = vshrl.u32 920167782, %v167
    %v180 = vor.u32 %v178, %v179
    %v181 = vshll.u32 920167782, %v166
    %v182 = vshrl.u32 1326507024, %v167
    %v183 = vor.u32 %v181, %v182
    %vm184 = vcmp.lt.s32.totalorder %v165, 1
    %vm185 = vcmp.lt.s32.totalorder %v165, 2
    %vm186 = vcmp.lt.s32.totalorder %v165, 3
    %vm187 = vcmp.lt.s32.totalorder %v165, 4
    %v188 = vsel %vm184, %v168, %v171
    %v189 = vsel %vm187, %v177, 2102212464
    %v190 = vsel %vm186, %v174, %v189
    %v191 = vsel %vm185, %v188, %v190
    %v192 = vsel %vm184, %v171, %v174
    %v193 = vsel %vm187, %v180, 920167782
    %v194 = vsel %vm186, %v177, %v193
    %v195 = vsel %vm185, %v192, %v194
    %v196 = vsel %vm184, %v174, %v177
    %v197 = vsel %vm187, %v183, 1326507024
    %v198 = vsel %vm186, %v180, %v197
    %v199 = vsel %vm185, %v196, %v198
    %v200 = vshll.u32 %v160, 8
    %v201 = vmul.u32.u64.compose %v200, %v199
    %v202 = vextract.low.u32 %v201
    %v203 = vextract.high.u32 %v201
    %v204 = vmul.u32.u64.compose %v200, %v195
    %v205 = vextract.low.u32 %v204
    %v206 = vextract.high.u32 %v204
    %v207 = vmul.u32 %v200, %v191
    %v208 = vadd.s32 %v203, %v205
    %vm209 = vc.u32 %v203, %v205
    %v210 = vadd.s32 %v206, 1
    %v211 = vsel %vm209, %v210, %v206
    %v212 = vadd.s32 %v207, %v211
    %v213 = vadd.s32 %v212, 536870912
    %v214 = vshrl.u32 %v213, 30
    %v215 = vshll.u32 %v214, 30
    %v216 = vsub.s32 %v212, %v215
    %vm217 = vcmp.lt.s32.totalorder %v216, 0
    %v218 = vsub.s32 0, %v216
    %v219 = vsel %vm217, %v218, %v216
    %v220 = vclz %v219
    %v221 = vsub.s32 %v220, 2
    %vm222 = vcmp.gt.s32.totalorder 0, %v221
    %v223 = vsel %vm222, 0, %v221
    %v224 = vsub.s32 32, %v223
    %v225 = vshll.u32 %v216, %v223
    %v226 = vshrl.u32 %v208, %v224
    %v227 = vor.u32 %v225, %v226
    %v228 = vsub.s32 4294967266, %v223
    %v229 = vadd.s32 %v228, 127
    %v230 = vshll.u32 %v229, 23
    %v231 = vor.u32 4788187, %v230
    %v232 = vand.u32 2147483647, %v231
    %v234 = vcvt.s32.f32 %v227
    %v235 = vmul.f32 %v234, %v232
    %v236 = vxor.u32 %v235, 2147483648
    %v237 = vsel %vm154, %v236, %v235
    %v238 = vsub.s32 4, %v214
    %v239 = vsel %vm154, %v238, %v214
    %v240 = vsel %vm153, %v44, %v237
    %v241 = vsel %vm153, 0, %v239
    %v242 = vcosq.f32.pop %v240
    %v243 = vsinq.f32.pop %v240
    %vm244 = vweird.f32 %v44
    %v245 = vadd.s32 %v241, 3
    %v246 = vand.u32 %v245, 3
    %vm247 = vcmp.lt.s32.totalorder %v246, 2
    %vm248 = vcmp.eq.s32.totalorder %v246, 0
    %v249 = vxor.u32 %v243, 2147483648
    %v250 = vsel %vm248, %v242, %v249
    %vm251 = vcmp.eq.s32.totalorder %v246, 2
    %v252 = vxor.u32 %v242, 2147483648
    %v253 = vsel %vm251, %v252, %v243
    %v254 = vsel %vm247, %v250, %v253
    %v255 = vsel %vm244, nan, %v254
    %v256 = vsel %vm47, 1, 0
    %vm257 = vcmp.eq.s32.totalorder %v256, 1
    %v258 = vsel %vm257, %v151, %v43
    %v259 = vsel %vm257, %v255, %v44
    %260 = vst [vmem:[#allocation2] sm:$0xff] %v258
    %261 = vst [vmem:[#allocation2 + $0x8] sm:$0xff] %v259
    // Predicated region
    $region14: #{tpu_custom_call.1} parent=1 // pred_check
      _
    $region15: #{tpu_custom_call.1} parent=1 // pred_check_branch
      %263 = sbr.rel (0) target = $region17
    $region16: #{tpu_custom_call.1} parent=1 // pred_region
      %s265 = ssub.s32 256, 256
      %266 = vsyncadd [#allocation3], %s265
      %s267 = sshll.u32 [#allocation2], 4
      %s268 = int_to_ptr.vmem [resolvable:$true] %s267
      %273 = dma.vmem_to_hbm [thread:$0]  %s268, 256, %s3, [#allocation3], 128, 128, 8
    $region17: #{tpu_custom_call.1} parent=1 // pred_fallthru
      _
    // Predicated region
    $region18: #{tpu_custom_call.1} parent=1 // pred_check
      _
    $region19: #{tpu_custom_call.1} parent=1 // pred_check_branch
      %275 = sbr.rel (0) target = $region21
    $region20: #{tpu_custom_call.1} parent=1 // pred_region
      %276 = dma.done [#allocation3], 256
    $region21: #{tpu_custom_call.1} parent=1 // pred_fallthru
      _
    %277 = vsyncpa [#allocation3], 1

</llo_original>
